<compile_context>
chip_gen: v7x
topology: tpu7x:2x2x1
jax: 0.10.0
libtpu: 0.0.40
codegen_flags: <defaults>
</compile_context>

<pallas_src>
import jax
import jax.numpy as jnp
from jax import lax
from jax.experimental import pallas as pl
from jax.experimental.pallas import tpu as pltpu


def _leaky_relu(x, slope=0.2):
    return jnp.where(x > 0, x, slope * x)


def _band_weights(w_hwio, W):
    """(3,3,Cin,Cout) HWIO weights -> (3, (W+2)*Cin, W*Cout) banded matrices.

    Image content occupies lane blocks 0..W-1 of each padded scratch row; the
    two zero-pad blocks sit at the END (blocks W, W+1).  Horizontal taps wrap
    modulo (W+2), so x-1 at the left edge reads zero-pad block W+1 and x+1 at
    the right edge reads zero-pad block W.  A matmul of a padded row-flattened
    activation block (rows, (W+2)*Cin) with wb[ky] yields that ky-tap's
    contribution to the lane-dense conv output (rows, W*Cout).
    """
    kh, kw, Cin, Cout = w_hwio.shape
    P = W + kw - 1
    pad = kw // 2
    wb = jnp.zeros((kh, P * Cin, W * Cout), w_hwio.dtype)
    for kx in range(kw):
        for x in range(W):
            p = (x + kx - pad) % P
            wb = wb.at[:, p * Cin:(p + 1) * Cin,
                       x * Cout:(x + 1) * Cout].set(w_hwio[:, kx])
    return wb


def basic_block_kernel(x_ref, wb1_ref, wb2_ref, b1_ref, b2_ref, o_ref, xp_ref):
    """conv3x3 -> bn1 -> lrelu -> conv3x3 -> bn2 -> (+x) -> lrelu (fused).

    x_ref : (Nb, H, W*C)          lane-dense activations
    wb*   : (3, (W+2)*C, W*C)     banded conv weights, BN scale pre-folded
    b*    : (1, W*C)              folded BN bias, tiled over W
    o_ref : (Nb, H, W*C)
    xp_ref: (Nb, H+2, (W+2)*C)    zero-bordered padded-activation scratch
    """
    Nb, H, WC = o_ref.shape
    PWC = xp_ref.shape[-1]

    # Zero the scratch each grid step (cheap, ~a few vreg stores).  Only the
    # border has to be zero -- the interior is overwritten before every read --
    # but a full zero is simplest and stays correct under megacore splitting.
    xp_ref[...] = jnp.zeros_like(xp_ref)

    b1 = b1_ref[...].reshape(1, 1, WC)
    b2 = b2_ref[...].reshape(1, 1, WC)

    def conv3x3(wb_ref):
        # One batched MXU matmul per ky tap over ALL images in the block:
        # (Nb*H, (W+2)*C) x ((W+2)*C, W*C); output is already lane-dense.
        # The (Nb, H, PWC) -> (Nb*H, PWC) reshape is a free leading-dim
        # collapse (H is a multiple of the 8-row sublane tile).
        acc = None
        for ky in range(wb_ref.shape[0]):                  # static unroll (3)
            lhs = xp_ref[:, ky:ky + H, :].reshape(Nb * H, PWC)
            part = jnp.dot(lhs, wb_ref[ky],
                           preferred_element_type=jnp.float32)
            acc = part if acc is None else acc + part
        return acc.reshape(Nb, H, WC)                      # (Nb, H, W*C) f32

    xv = x_ref[...]                                        # (Nb, H, W*C)

    # conv1 (BN1 scale folded into weights) + bias + LeakyReLU(0.2)
    xp_ref[:, 1:H + 1, 0:WC] = xv                          # lane-aligned write
    out1 = _leaky_relu(conv3x3(wb1_ref) + b1)

    # conv2 (BN2 scale folded) + bias
    xp_ref[:, 1:H + 1, 0:WC] = out1.astype(xp_ref.dtype)
    out2 = conv3x3(wb2_ref) + b2

    # residual (stride=1, downsample=None -> identity = x) + LeakyReLU(0.2)
    out = _leaky_relu(out2 + xv.astype(jnp.float32))
    o_ref[...] = out.astype(o_ref.dtype)                   # lane-dense store


def basic_block(x, w1_hwio, w2_hwio, s1, b1, s2, b2, *, block_n=None):
    """x: (N,H,W,C). w*: (3,3,Cin,Cout) HWIO. s*/b*: (Cout,) folded eval-BN."""
    N, H, W, Cin = x.shape
    Cout = w1_hwio.shape[-1]
    assert Cin == Cout, "identity path requires inplanes == planes"
    if block_n is None:
        block_n = min(N, 8)
    assert N % block_n == 0

    # Banded conv weights with the eval-BN per-channel scale folded into the
    # output columns (valid: BN scale is linear & per output channel).
    s1l = jnp.tile(s1.reshape(1, Cout), (1, W)).reshape(-1).astype(jnp.float32)
    s2l = jnp.tile(s2.reshape(1, Cout), (1, W)).reshape(-1).astype(jnp.float32)
    wb1 = (_band_weights(w1_hwio, W).astype(jnp.float32)
           * s1l[None, None, :]).astype(x.dtype)           # (3,(W+2)*Cin,W*Cout)
    wb2 = (_band_weights(w2_hwio, W).astype(jnp.float32)
           * s2l[None, None, :]).astype(x.dtype)
    b1l = jnp.tile(b1.reshape(1, Cout), (1, W)).astype(jnp.float32)  # (1,W*Cout)
    b2l = jnp.tile(b2.reshape(1, Cout), (1, W)).astype(jnp.float32)

    # Lane-dense view of the input (contiguous reshape -> no HBM copy).
    x2 = x.reshape(N, H, W * Cin)

    out2 = pl.pallas_call(
        basic_block_kernel,
        out_shape=jax.ShapeDtypeStruct((N, H, W * Cout), x.dtype),
        grid_spec=pltpu.PrefetchScalarGridSpec(
            num_scalar_prefetch=0,
            grid=(N // block_n,),
            in_specs=[
                pl.BlockSpec((block_n, H, W * Cin), lambda i: (i, 0, 0)),
                pl.BlockSpec((3, (W + 2) * Cin, W * Cout),
                             lambda i: (0, 0, 0)),
                pl.BlockSpec((3, (W + 2) * Cout, W * Cout),
                             lambda i: (0, 0, 0)),
                pl.BlockSpec((1, W * Cout), lambda i: (0, 0)),
                pl.BlockSpec((1, W * Cout), lambda i: (0, 0)),
            ],
            out_specs=pl.BlockSpec((block_n, H, W * Cout),
                                   lambda i: (i, 0, 0)),
            scratch_shapes=[
                pltpu.VMEM((block_n, H + 2, (W + 2) * Cin), x.dtype),
            ],
        ),
        compiler_params=pltpu.CompilerParams(
            dimension_semantics=("parallel",),      # v7x: 2 TCs split batch
            vmem_limit_bytes=32 * 1024 * 1024,      # explicit; safe on v7x
        ),
    )(x2, wb1, wb2, b1l, b2l)
    return out2.reshape(N, H, W, Cout)


def ref_basic_block(x, w1_hwio, w2_hwio, s1, b1, s2, b2):
    # Pure-JAX reference (NHWC, HWIO), stride=1, padding=1 == SAME.
    dn = lax.conv_dimension_numbers(x.shape, w1_hwio.shape,
                                    ("NHWC", "HWIO", "NHWC"))
    out = lax.conv_general_dilated(x, w1_hwio, (1, 1), "SAME",
                                   dimension_numbers=dn,
                                   precision=lax.Precision.HIGHEST)
    out = out * s1.reshape(1, 1, 1, -1) + b1.reshape(1, 1, 1, -1)
    out = jnp.where(out > 0, out, 0.2 * out)
    out = lax.conv_general_dilated(out, w2_hwio, (1, 1), "SAME",
                                   dimension_numbers=dn,
                                   precision=lax.Precision.HIGHEST)
    out = out * s2.reshape(1, 1, 1, -1) + b2.reshape(1, 1, 1, -1)
    out = out + x
    return jnp.where(out > 0, out, 0.2 * out)


if __name__ == "__main__":
    key = jax.random.PRNGKey(0)
    ks = jax.random.split(key, 12)

    N, H, W = 2, 16, 16
    inplanes = planes = 8          # residual requires inplanes == planes
    x = jax.random.normal(ks[0], (N, H, W, inplanes), jnp.float32)

    # Conv weights (PyTorch OIHW -> HWIO).
    w1_oihw = 0.1 * jax.random.normal(ks[1], (planes, inplanes, 3, 3),
                                      jnp.float32)
    w2_oihw = 0.1 * jax.random.normal(ks[2], (planes, planes, 3, 3),
                                      jnp.float32)
    w1_hwio = jnp.transpose(w1_oihw, (2, 3, 1, 0))
    w2_hwio = jnp.transpose(w2_oihw, (2, 3, 1, 0))

    # BatchNorm (inference mode, running stats) folded into scale/bias.
    eps = 1e-5
    gamma1 = 1.0 + 0.1 * jax.random.normal(ks[3], (planes,), jnp.float32)
    beta1 = 0.1 * jax.random.normal(ks[4], (planes,), jnp.float32)
    mean1 = 0.05 * jax.random.normal(ks[5], (planes,), jnp.float32)
    var1 = 1.0 + 0.1 * jax.random.uniform(ks[6], (planes,), jnp.float32)
    gamma2 = 1.0 + 0.1 * jax.random.normal(ks[7], (planes,), jnp.float32)
    beta2 = 0.1 * jax.random.normal(ks[8], (planes,), jnp.float32)
    mean2 = 0.05 * jax.random.normal(ks[9], (planes,), jnp.float32)
    var2 = 1.0 + 0.1 * jax.random.uniform(ks[10], (planes,), jnp.float32)

    s1 = gamma1 / jnp.sqrt(var1 + eps)
    b1 = beta1 - mean1 * s1
    s2 = gamma2 / jnp.sqrt(var2 + eps)
    b2 = beta2 - mean2 * s2

    out = basic_block(x, w1_hwio, w2_hwio, s1, b1, s2, b2)
    out = jax.block_until_ready(out)

    ref = ref_basic_block(x, w1_hwio, w2_hwio, s1, b1, s2, b2)
    assert out.shape == (N, H, W, planes)
    err = float(jnp.max(jnp.abs(out - ref)))
    assert jnp.allclose(out, ref, atol=1e-3, rtol=1e-3), err
    print("KERNEL_OK")
</pallas_src>

<mosaic_0001>
module attributes {stable_mosaic.version = 11 : i64} {
  func.func @basic_block_kernel(%arg0: i32, %arg1: memref<2x16x128xf32, #tpu.memory_space<vmem>>, %arg2: memref<3x144x128xf32, #tpu.memory_space<vmem>>, %arg3: memref<3x144x128xf32, #tpu.memory_space<vmem>>, %arg4: memref<1x128xf32, #tpu.memory_space<vmem>>, %arg5: memref<1x128xf32, #tpu.memory_space<vmem>>, %arg6: memref<2x16x128xf32, #tpu.memory_space<vmem>>, %arg7: memref<2x18x144xf32, #tpu.memory_space<vmem>>) attributes {dimension_semantics = [#tpu.dimension_semantics<parallel>], iteration_bounds = array<i64: 1>, scalar_prefetch = 0 : i64, scratch_operands = 1 : i64, tpu.core_type = #tpu.core_type<tc>, window_params = [{transform_indices = @transform_0, window_bounds = array<i64: 2, 16, 128>}, {pipeline_mode = #tpu.pipeline_mode<synchronous>, transform_indices = @transform_1, window_bounds = array<i64: 3, 144, 128>}, {pipeline_mode = #tpu.pipeline_mode<synchronous>, transform_indices = @transform_2, window_bounds = array<i64: 3, 144, 128>}, {pipeline_mode = #tpu.pipeline_mode<synchronous>, transform_indices = @transform_3, window_bounds = array<i64: 1, 128>}, {pipeline_mode = #tpu.pipeline_mode<synchronous>, transform_indices = @transform_4, window_bounds = array<i64: 1, 128>}, {transform_indices = @transform_5, window_bounds = array<i64: 2, 16, 128>}]} {
    %cst = arith.constant 0.000000e+00 : f32
    %0 = vector.broadcast %cst : f32 to vector<2x18x144xf32>
    %c0 = arith.constant 0 : index
    %c0_0 = arith.constant 0 : index
    %c0_1 = arith.constant 0 : index
    %1 = vector.load %arg7[%c0, %c0_0, %c0_1] : memref<2x18x144xf32, #tpu.memory_space<vmem>>, vector<2x18x144xf32>
    tpu.vector_store %arg7[%c0, %c0_0, %c0_1], %0 {strides = array<i32>} : memref<2x18x144xf32, #tpu.memory_space<vmem>>, vector<2x18x144xf32>,
    %c0_2 = arith.constant 0 : index
    %c0_3 = arith.constant 0 : index
    %2 = vector.load %arg4[%c0_2, %c0_3] : memref<1x128xf32, #tpu.memory_space<vmem>>, vector<1x128xf32>
    %3 = vector.shape_cast %2 : vector<1x128xf32> to vector<1x1x128xf32>
    %c0_4 = arith.constant 0 : index
    %c0_5 = arith.constant 0 : index
    %4 = vector.load %arg5[%c0_4, %c0_5] : memref<1x128xf32, #tpu.memory_space<vmem>>, vector<1x128xf32>
    %5 = vector.shape_cast %4 : vector<1x128xf32> to vector<1x1x128xf32>
    %c0_6 = arith.constant 0 : index
    %c0_7 = arith.constant 0 : index
    %c0_8 = arith.constant 0 : index
    %6 = vector.load %arg1[%c0_6, %c0_7, %c0_8] : memref<2x16x128xf32, #tpu.memory_space<vmem>>, vector<2x16x128xf32>
    %c0_9 = arith.constant 0 : index
    %c1 = arith.constant 1 : index
    %c0_10 = arith.constant 0 : index
    %7 = vector.load %arg7[%c0_9, %c1, %c0_10] : memref<2x18x144xf32, #tpu.memory_space<vmem>>, vector<2x16x128xf32>
    tpu.vector_store %arg7[%c0_9, %c1, %c0_10], %6 {strides = array<i32>} : memref<2x18x144xf32, #tpu.memory_space<vmem>>, vector<2x16x128xf32>,
    %c0_11 = arith.constant 0 : index
    %c0_12 = arith.constant 0 : index
    %c0_13 = arith.constant 0 : index
    %8 = vector.load %arg7[%c0_11, %c0_12, %c0_13] : memref<2x18x144xf32, #tpu.memory_space<vmem>>, vector<2x16x144xf32>
    %9 = vector.shape_cast %8 : vector<2x16x144xf32> to vector<32x144xf32>
    %c0_14 = arith.constant 0 : index
    %c0_15 = arith.constant 0 : index
    %c0_16 = arith.constant 0 : index
    %10 = vector.load %arg2[%c0_14, %c0_15, %c0_16] : memref<3x144x128xf32, #tpu.memory_space<vmem>>, vector<1x144x128xf32>
    %11 = vector.shape_cast %10 : vector<1x144x128xf32> to vector<144x128xf32>
    %cst_17 = arith.constant dense<0.000000e+00> : vector<32x128xf32>
    %12 = tpu.matmul %9, %11, %cst_17 {dimension_numbers = #tpu.dot_dimension_numbers<[1], [0], [0], [1], [0, 0, 1, 1], [], []>} : vector<32x144xf32>, vector<144x128xf32>, vector<32x128xf32> -> vector<32x128xf32>
    %c0_18 = arith.constant 0 : index
    %c1_19 = arith.constant 1 : index
    %c0_20 = arith.constant 0 : index
    %13 = vector.load %arg7[%c0_18, %c1_19, %c0_20] : memref<2x18x144xf32, #tpu.memory_space<vmem>>, vector<2x16x144xf32>
    %14 = vector.shape_cast %13 : vector<2x16x144xf32> to vector<32x144xf32>
    %c1_21 = arith.constant 1 : index
    %c0_22 = arith.constant 0 : index
    %c0_23 = arith.constant 0 : index
    %15 = vector.load %arg2[%c1_21, %c0_22, %c0_23] : memref<3x144x128xf32, #tpu.memory_space<vmem>>, vector<1x144x128xf32>
    %16 = vector.shape_cast %15 : vector<1x144x128xf32> to vector<144x128xf32>
    %cst_24 = arith.constant dense<0.000000e+00> : vector<32x128xf32>
    %17 = tpu.matmul %14, %16, %cst_24 {dimension_numbers = #tpu.dot_dimension_numbers<[1], [0], [0], [1], [0, 0, 1, 1], [], []>} : vector<32x144xf32>, vector<144x128xf32>, vector<32x128xf32> -> vector<32x128xf32>
    %18 = arith.addf %12, %17 : vector<32x128xf32>
    %c0_25 = arith.constant 0 : index
    %c2 = arith.constant 2 : index
    %c0_26 = arith.constant 0 : index
    %19 = vector.load %arg7[%c0_25, %c2, %c0_26] : memref<2x18x144xf32, #tpu.memory_space<vmem>>, vector<2x16x144xf32>
    %20 = vector.shape_cast %19 : vector<2x16x144xf32> to vector<32x144xf32>
    %c2_27 = arith.constant 2 : index
    %c0_28 = arith.constant 0 : index
    %c0_29 = arith.constant 0 : index
    %21 = vector.load %arg2[%c2_27, %c0_28, %c0_29] : memref<3x144x128xf32, #tpu.memory_space<vmem>>, vector<1x144x128xf32>
    %22 = vector.shape_cast %21 : vector<1x144x128xf32> to vector<144x128xf32>
    %cst_30 = arith.constant dense<0.000000e+00> : vector<32x128xf32>
    %23 = tpu.matmul %20, %22, %cst_30 {dimension_numbers = #tpu.dot_dimension_numbers<[1], [0], [0], [1], [0, 0, 1, 1], [], []>} : vector<32x144xf32>, vector<144x128xf32>, vector<32x128xf32> -> vector<32x128xf32>
    %24 = arith.addf %18, %23 : vector<32x128xf32>
    %25 = vector.shape_cast %24 : vector<32x128xf32> to vector<2x16x128xf32>
    %26 = vector.broadcast %3 : vector<1x1x128xf32> to vector<2x16x128xf32>
    %27 = arith.addf %25, %26 : vector<2x16x128xf32>
    %cst_31 = arith.constant 0.000000e+00 : f32
    %28 = vector.broadcast %cst_31 : f32 to vector<2x16x128xf32>
    %29 = arith.cmpf ogt, %27, %28 : vector<2x16x128xf32>
    %cst_32 = arith.constant 2.000000e-01 : f32
    %30 = vector.broadcast %cst_32 : f32 to vector<2x16x128xf32>
    %31 = arith.mulf %30, %27 : vector<2x16x128xf32>
    %32 = arith.select %29, %27, %31 : vector<2x16x128xi1>, vector<2x16x128xf32>
    %c0_33 = arith.constant 0 : index
    %c1_34 = arith.constant 1 : index
    %c0_35 = arith.constant 0 : index
    %33 = vector.load %arg7[%c0_33, %c1_34, %c0_35] : memref<2x18x144xf32, #tpu.memory_space<vmem>>, vector<2x16x128xf32>
    tpu.vector_store %arg7[%c0_33, %c1_34, %c0_35], %32 {strides = array<i32>} : memref<2x18x144xf32, #tpu.memory_space<vmem>>, vector<2x16x128xf32>,
    %c0_36 = arith.constant 0 : index
    %c0_37 = arith.constant 0 : index
    %c0_38 = arith.constant 0 : index
    %34 = vector.load %arg7[%c0_36, %c0_37, %c0_38] : memref<2x18x144xf32, #tpu.memory_space<vmem>>, vector<2x16x144xf32>
    %35 = vector.shape_cast %34 : vector<2x16x144xf32> to vector<32x144xf32>
    %c0_39 = arith.constant 0 : index
    %c0_40 = arith.constant 0 : index
    %c0_41 = arith.constant 0 : index
    %36 = vector.load %arg3[%c0_39, %c0_40, %c0_41] : memref<3x144x128xf32, #tpu.memory_space<vmem>>, vector<1x144x128xf32>
    %37 = vector.shape_cast %36 : vector<1x144x128xf32> to vector<144x128xf32>
    %cst_42 = arith.constant dense<0.000000e+00> : vector<32x128xf32>
    %38 = tpu.matmul %35, %37, %cst_42 {dimension_numbers = #tpu.dot_dimension_numbers<[1], [0], [0], [1], [0, 0, 1, 1], [], []>} : vector<32x144xf32>, vector<144x128xf32>, vector<32x128xf32> -> vector<32x128xf32>
    %c0_43 = arith.constant 0 : index
    %c1_44 = arith.constant 1 : index
    %c0_45 = arith.constant 0 : index
    %39 = vector.load %arg7[%c0_43, %c1_44, %c0_45] : memref<2x18x144xf32, #tpu.memory_space<vmem>>, vector<2x16x144xf32>
    %40 = vector.shape_cast %39 : vector<2x16x144xf32> to vector<32x144xf32>
    %c1_46 = arith.constant 1 : index
    %c0_47 = arith.constant 0 : index
    %c0_48 = arith.constant 0 : index
    %41 = vector.load %arg3[%c1_46, %c0_47, %c0_48] : memref<3x144x128xf32, #tpu.memory_space<vmem>>, vector<1x144x128xf32>
    %42 = vector.shape_cast %41 : vector<1x144x128xf32> to vector<144x128xf32>
    %cst_49 = arith.constant dense<0.000000e+00> : vector<32x128xf32>
    %43 = tpu.matmul %40, %42, %cst_49 {dimension_numbers = #tpu.dot_dimension_numbers<[1], [0], [0], [1], [0, 0, 1, 1], [], []>} : vector<32x144xf32>, vector<144x128xf32>, vector<32x128xf32> -> vector<32x128xf32>
    %44 = arith.addf %38, %43 : vector<32x128xf32>
    %c0_50 = arith.constant 0 : index
    %c2_51 = arith.constant 2 : index
    %c0_52 = arith.constant 0 : index
    %45 = vector.load %arg7[%c0_50, %c2_51, %c0_52] : memref<2x18x144xf32, #tpu.memory_space<vmem>>, vector<2x16x144xf32>
    %46 = vector.shape_cast %45 : vector<2x16x144xf32> to vector<32x144xf32>
    %c2_53 = arith.constant 2 : index
    %c0_54 = arith.constant 0 : index
    %c0_55 = arith.constant 0 : index
    %47 = vector.load %arg3[%c2_53, %c0_54, %c0_55] : memref<3x144x128xf32, #tpu.memory_space<vmem>>, vector<1x144x128xf32>
    %48 = vector.shape_cast %47 : vector<1x144x128xf32> to vector<144x128xf32>
    %cst_56 = arith.constant dense<0.000000e+00> : vector<32x128xf32>
    %49 = tpu.matmul %46, %48, %cst_56 {dimension_numbers = #tpu.dot_dimension_numbers<[1], [0], [0], [1], [0, 0, 1, 1], [], []>} : vector<32x144xf32>, vector<144x128xf32>, vector<32x128xf32> -> vector<32x128xf32>
    %50 = arith.addf %44, %49 : vector<32x128xf32>
    %51 = vector.shape_cast %50 : vector<32x128xf32> to vector<2x16x128xf32>
    %52 = vector.broadcast %5 : vector<1x1x128xf32> to vector<2x16x128xf32>
    %53 = arith.addf %51, %52 : vector<2x16x128xf32>
    %54 = arith.addf %53, %6 : vector<2x16x128xf32>
    %cst_57 = arith.constant 0.000000e+00 : f32
    %55 = vector.broadcast %cst_57 : f32 to vector<2x16x128xf32>
    %56 = arith.cmpf ogt, %54, %55 : vector<2x16x128xf32>
    %cst_58 = arith.constant 2.000000e-01 : f32
    %57 = vector.broadcast %cst_58 : f32 to vector<2x16x128xf32>
    %58 = arith.mulf %57, %54 : vector<2x16x128xf32>
    %59 = arith.select %56, %54, %58 : vector<2x16x128xi1>, vector<2x16x128xf32>
    %c0_59 = arith.constant 0 : index
    %c0_60 = arith.constant 0 : index
    %c0_61 = arith.constant 0 : index
    %60 = vector.load %arg6[%c0_59, %c0_60, %c0_61] : memref<2x16x128xf32, #tpu.memory_space<vmem>>, vector<2x16x128xf32>
    tpu.vector_store %arg6[%c0_59, %c0_60, %c0_61], %59 {strides = array<i32>} : memref<2x16x128xf32, #tpu.memory_space<vmem>>, vector<2x16x128xf32>,
    return
  }
  func.func @transform_0(%arg0: i32) -> (i32, i32, i32) {
    %c0_i32 = arith.constant 0 : i32
    %c0_i32_0 = arith.constant 0 : i32
    %c0_i32_1 = arith.constant 0 : i32
    return %arg0, %c0_i32, %c0_i32_0 : i32, i32, i32
  }
  func.func @transform_1(%arg0: i32) -> (i32, i32, i32) {
    %c0_i32 = arith.constant 0 : i32
    %c0_i32_0 = arith.constant 0 : i32
    %c0_i32_1 = arith.constant 0 : i32
    %c0_i32_2 = arith.constant 0 : i32
    return %c0_i32, %c0_i32_0, %c0_i32_1 : i32, i32, i32
  }
  func.func @transform_2(%arg0: i32) -> (i32, i32, i32) {
    %c0_i32 = arith.constant 0 : i32
    %c0_i32_0 = arith.constant 0 : i32
    %c0_i32_1 = arith.constant 0 : i32
    %c0_i32_2 = arith.constant 0 : i32
    return %c0_i32, %c0_i32_0, %c0_i32_1 : i32, i32, i32
  }
  func.func @transform_3(%arg0: i32) -> (i32, i32) {
    %c0_i32 = arith.constant 0 : i32
    %c0_i32_0 = arith.constant 0 : i32
    %c0_i32_1 = arith.constant 0 : i32
    return %c0_i32, %c0_i32_0 : i32, i32
  }
  func.func @transform_4(%arg0: i32) -> (i32, i32) {
    %c0_i32 = arith.constant 0 : i32
    %c0_i32_0 = arith.constant 0 : i32
    %c0_i32_1 = arith.constant 0 : i32
    return %c0_i32, %c0_i32_0 : i32, i32
  }
  func.func @transform_5(%arg0: i32) -> (i32, i32, i32) {
    %c0_i32 = arith.constant 0 : i32
    %c0_i32_0 = arith.constant 0 : i32
    %c0_i32_1 = arith.constant 0 : i32
    return %arg0, %c0_i32, %c0_i32_0 : i32, i32, i32
  }
}

</mosaic_0001>

<llo_original>
// kernel: tpu_custom_call.1
$region0: #{tpu_custom_call.1}
  #allocation0 [shape = 'u32[]', space=smem, size = 0x4, offset = 0x4, fixed_abs, tag = 'smem constant byte address 0x4 - core index']
  #allocation1 [shape = 'u32[144,128]{1,0:T(1,128)}', space=vmem, size = 0x12000, scoped, tag = 'internal scratch']
  #allocation2 [shape = 'f32[2,18,144]{2,1,0:T(8,128)}', space=vmem, size = 0xc000, scoped, tag = 'scratch operand']
  %s0 = inlined_call_operand.hbm [shape: f32[2,16,128], index: 0, kind: input, shape index: {}]
  %s1 = inlined_call_operand.hbm [shape: f32[3,144,128], index: 1, kind: input, shape index: {}]
  %s2 = inlined_call_operand.hbm [shape: f32[3,144,128], index: 2, kind: input, shape index: {}]
  %s3 = inlined_call_operand.vmem [shape: f32[1,128], index: 3, kind: input, shape index: {}]
  %s4 = inlined_call_operand.vmem [shape: f32[1,128], index: 4, kind: input, shape index: {}]
  %s5 = inlined_call_operand.hbm [shape: f32[2,16,128], index: 5, kind: output, shape index: {}]
  %s6 = sld [smem:[#allocation0]]
  $region42: #{tpu_custom_call.1} parent=0
    _
  %s8 = ssub.s32 1, %s6
  %s9 = scalar_select 0, %s8, %s6
  $region1: #{tpu_custom_call.1} parent=0
    #allocation3 [shape = 'u8[16384]{0}', space=vmem, size = 0x4000, scoped, tag = 'input window, operand 0, single buffered']
    #allocation4 [shape = 's32[1]{0}', space=sflag, size = 0x4, scoped, tag = 'scoped memory for tpu_custom_call.1']
    #allocation5 [shape = 's32[1]{0}', space=sflag, size = 0x4, scoped, tag = 'scoped memory for tpu_custom_call.1']
    #allocation6 [shape = 'u8[221184]{0}', space=vmem, size = 0x36000, scoped, tag = 'input window, operand 1, single buffered']
    #allocation7 [shape = 's32[1]{0}', space=sflag, size = 0x4, scoped, tag = 'scoped memory for tpu_custom_call.1']
    #allocation8 [shape = 'u8[221184]{0}', space=vmem, size = 0x36000, scoped, tag = 'input window, operand 2, single buffered']
    #allocation9 [shape = 'u8[16384]{0}', space=vmem, size = 0x4000, scoped, tag = 'output window, operand 0, single buffered']
    %10 = vsyncpa [#allocation4], 0
    %11 = vsyncpa [#allocation7], 0
    %12 = vsyncpa [#allocation5], 0
    // Predicated region
    $region2: #{tpu_custom_call.1} parent=1 // pred_check
      _
    $region3: #{tpu_custom_call.1} parent=1 // pred_check_branch
      %14 = sbr.rel (0) target = $region5
    $region4: #{tpu_custom_call.1} parent=1 // pred_region
      %s16 = ssub.s32 512, 512
      %17 = vsyncadd [#allocation4], %s16
      %s18 = sshll.u32 [#allocation3], 4
      %s19 = int_to_ptr.vmem [resolvable:$true] %s18
      %24 = dma.hbm_to_vmem [thread:$0]  %s0, 512, %s19, [#allocation4], 128, 128, 8
    $region5: #{tpu_custom_call.1} parent=1 // pred_fallthru
      _
    // Predicated region
    $region6: #{tpu_custom_call.1} parent=1 // pred_check
      _
    $region7: #{tpu_custom_call.1} parent=1 // pred_check_branch
      %26 = sbr.rel (0) target = $region9
    $region8: #{tpu_custom_call.1} parent=1 // pred_region
      %s28 = ssub.s32 6912, 6912
      %29 = vsyncadd [#allocation7], %s28
      %s30 = sshll.u32 [#allocation6], 4
      %s31 = int_to_ptr.vmem [resolvable:$true] %s30
      %36 = dma.hbm_to_vmem [thread:$0]  %s1, 6912, %s31, [#allocation7], 128, 128, 8
    $region9: #{tpu_custom_call.1} parent=1 // pred_fallthru
      _
    // Predicated region
    $region10: #{tpu_custom_call.1} parent=1 // pred_check
      _
    $region11: #{tpu_custom_call.1} parent=1 // pred_check_branch
      %38 = sbr.rel (0) target = $region13
    $region12: #{tpu_custom_call.1} parent=1 // pred_region
      %s40 = ssub.s32 6912, 6912
      %41 = vsyncadd [#allocation7], %s40
      %s42 = sshll.u32 [#allocation8], 4
      %s43 = int_to_ptr.vmem [resolvable:$true] %s42
      %48 = dma.hbm_to_vmem [thread:$0]  %s2, 6912, %s43, [#allocation7], 128, 128, 8
    $region13: #{tpu_custom_call.1} parent=1 // pred_fallthru
      _
    // Predicated region
    $region14: #{tpu_custom_call.1} parent=1 // pred_check
      _
    $region15: #{tpu_custom_call.1} parent=1 // pred_check_branch
      %50 = sbr.rel (0) target = $region17
    $region16: #{tpu_custom_call.1} parent=1 // pred_region
      _
    $region17: #{tpu_custom_call.1} parent=1 // pred_fallthru
      _
    // Predicated region
    $region18: #{tpu_custom_call.1} parent=1 // pred_check
      _
    $region19: #{tpu_custom_call.1} parent=1 // pred_check_branch
      %52 = sbr.rel (0) target = $region21
    $region20: #{tpu_custom_call.1} parent=1 // pred_region
      _
    $region21: #{tpu_custom_call.1} parent=1 // pred_fallthru
      _
    // Predicated region
    $region22: #{tpu_custom_call.1} parent=1 // pred_check
      _
    $region23: #{tpu_custom_call.1} parent=1 // pred_check_branch
      %54 = sbr.rel (0) target = $region25
    $region24: #{tpu_custom_call.1} parent=1 // pred_region
      %55 = dma.done [#allocation4], 512
    $region25: #{tpu_custom_call.1} parent=1 // pred_fallthru
      _
    // Predicated region
    $region26: #{tpu_custom_call.1} parent=1 // pred_check
      _
    $region27: #{tpu_custom_call.1} parent=1 // pred_check_branch
      %57 = sbr.rel (0) target = $region29
    $region28: #{tpu_custom_call.1} parent=1 // pred_region
      %58 = dma.done [#allocation7], 6912
    $region29: #{tpu_custom_call.1} parent=1 // pred_fallthru
      _
    // Predicated region
    $region30: #{tpu_custom_call.1} parent=1 // pred_check
      _
    $region31: #{tpu_custom_call.1} parent=1 // pred_check_branch
      %60 = sbr.rel (0) target = $region33
    $region32: #{tpu_custom_call.1} parent=1 // pred_region
      %61 = dma.done [#allocation7], 6912
    $region33: #{tpu_custom_call.1} parent=1 // pred_fallthru
      _
    %62 = vst [vmem:[#allocation2] sm:$0xff] 0.0
    %vm63 = vcmask 130048
    %64 = vst.msk [vmem:[#allocation2 + $0x8] sm:$0xff] %vm63, 0.0
    %65 = vst [vmem:[#allocation2 + $0x10] sm:$0xff] 0.0
    %66 = vst.msk [vmem:[#allocation2 + $0x18] sm:$0xff] %vm63, 0.0
    %67 = vst [vmem:[#allocation2 + $0x20] sm:$0x3] 0.0
    %vm68 = vcmask 123904
    %69 = vst.msk [vmem:[#allocation2 + $0x28] sm:$0x3] %vm68, 0.0
    %70 = vst [vmem:[#allocation2 + $0x30] sm:$0xff] 0.0
    %71 = vst.msk [vmem:[#allocation2 + $0x38] sm:$0xff] %vm63, 0.0
    %72 = vst [vmem:[#allocation2 + $0x40] sm:$0xff] 0.0
    %73 = vst.msk [vmem:[#allocation2 + $0x48] sm:$0xff] %vm63, 0.0
    %74 = vst [vmem:[#allocation2 + $0x50] sm:$0x3] 0.0
    %75 = vst.msk [vmem:[#allocation2 + $0x58] sm:$0x3] %vm68, 0.0
    %v76 = vld [vmem:[%s3] sm:$0x1]
    %v77 = vld [vmem:[%s4] sm:$0x1]
    %v78 = vld [vmem:[#allocation3] sm:$0xff]
    %v79 = vld [vmem:[#allocation3 + $0x8] sm:$0xff]
    %v80 = vld [vmem:[#allocation3 + $0x10] sm:$0xff]
    %v81 = vld [vmem:[#allocation3 + $0x18] sm:$0xff]
    %vm86 = vcmask 1040384
    %v87 = vrot.slane %v78, 7
    %v88 = vrot.slane %v79, 7
    %v89 = vsel %vm86, %v87, %v88
    %v90 = vrot.slane %v80, 7
    %v91 = vrot.slane %v81, 7
    %v92 = vsel %vm86, %v90, %v91
    %99 = vst [vmem:[#allocation2] sm:$0xfe] %v87
    %100 = vst [vmem:[#allocation2 + $0x10] sm:$0xff] %v89
    %101 = vst [vmem:[#allocation2 + $0x20] sm:$0x1] %v88
    %102 = vst [vmem:[#allocation2 + $0x30] sm:$0xfe] %v90
    %103 = vst [vmem:[#allocation2 + $0x40] sm:$0xff] %v92
    %104 = vst [vmem:[#allocation2 + $0x50] sm:$0x1] %v91
    %v105 = vld [vmem:[#allocation2] sm:$0xff]
    %v106 = vld [vmem:[#allocation2 + $0x8] sm:$0xff]
    %v107 = vld [vmem:[#allocation2 + $0x10] sm:$0xff]
    %v108 = vld [vmem:[#allocation2 + $0x18] sm:$0xff]
    %v109 = vld [vmem:[#allocation2 + $0x30] sm:$0xff]
    %v110 = vld [vmem:[#allocation2 + $0x38] sm:$0xff]
    %v111 = vld [vmem:[#allocation2 + $0x40] sm:$0xff]
    %v112 = vld [vmem:[#allocation2 + $0x48] sm:$0xff]
    %v113 = vld [vmem:[#allocation6] sm:$0xff]
    %v114 = vld [vmem:[#allocation6 + $0x8] sm:$0xff]
    %v115 = vld [vmem:[#allocation6 + $0x10] sm:$0xff]
    %v116 = vld [vmem:[#allocation6 + $0x18] sm:$0xff]
    %v117 = vld [vmem:[#allocation6 + $0x20] sm:$0xff]
    %v118 = vld [vmem:[#allocation6 + $0x28] sm:$0xff]
    %v119 = vld [vmem:[#allocation6 + $0x30] sm:$0xff]
    %v120 = vld [vmem:[#allocation6 + $0x38] sm:$0xff]
    %v121 = vld [vmem:[#allocation6 + $0x40] sm:$0xff]
    %v122 = vld [vmem:[#allocation6 + $0x48] sm:$0xff]
    %v123 = vld [vmem:[#allocation6 + $0x50] sm:$0xff]
    %v124 = vld [vmem:[#allocation6 + $0x58] sm:$0xff]
    %v125 = vld [vmem:[#allocation6 + $0x60] sm:$0xff]
    %v126 = vld [vmem:[#allocation6 + $0x68] sm:$0xff]
    %v127 = vld [vmem:[#allocation6 + $0x70] sm:$0xff]
    %v128 = vld [vmem:[#allocation6 + $0x78] sm:$0xff]
    %v129 = vld [vmem:[#allocation6 + $0x80] sm:$0xff]
    %v130 = vld [vmem:[#allocation6 + $0x88] sm:$0xff]
    %v131 = vld [vmem:[#allocation2] sm:$0xfe]
    %v132 = vld [vmem:[#allocation2 + $0x8] sm:$0xfe]
    %v133 = vld [vmem:[#allocation2 + $0x20] sm:$0x1]
    %v134 = vld [vmem:[#allocation2 + $0x28] sm:$0x1]
    %v135 = vld [vmem:[#allocation2 + $0x30] sm:$0xfe]
    %v136 = vld [vmem:[#allocation2 + $0x38] sm:$0xfe]
    %v137 = vld [vmem:[#allocation2 + $0x50] sm:$0x1]
    %v138 = vld [vmem:[#allocation2 + $0x58] sm:$0x1]
    %vm151 = vcmask 1046528
    %v152 = vrot.slane %v131, 1
    %v153 = vrot.slane %v107, 1
    %v154 = vsel %vm151, %v152, %v153
    %v155 = vrot.slane %v132, 1
    %v156 = vrot.slane %v108, 1
    %v157 = vsel %vm151, %v155, %v156
    %v158 = vrot.slane %v133, 1
    %v159 = vsel %vm151, %v153, %v158
    %v160 = vrot.slane %v134, 1
    %v161 = vsel %vm151, %v156, %v160
    %v162 = vrot.slane %v135, 1
    %v163 = vrot.slane %v111, 1
    %v164 = vsel %vm151, %v162, %v163
    %v165 = vrot.slane %v136, 1
    %v166 = vrot.slane %v112, 1
    %v167 = vsel %vm151, %v165, %v166
    %v168 = vrot.slane %v137, 1
    %v169 = vsel %vm151, %v163, %v168
    %v170 = vrot.slane %v138, 1
    %v171 = vsel %vm151, %v166, %v170
    %s176 = scalar_lea.vmem [#allocation6], 144
    %v177 = vld [vmem:[%s176] sm:$0xff]
    %v178 = vld [vmem:[%s176 + $0x8] sm:$0xff]
    %v179 = vld [vmem:[%s176 + $0x10] sm:$0xff]
    %v180 = vld [vmem:[%s176 + $0x18] sm:$0xff]
    %v181 = vld [vmem:[%s176 + $0x20] sm:$0xff]
    %v182 = vld [vmem:[%s176 + $0x28] sm:$0xff]
    %v183 = vld [vmem:[%s176 + $0x30] sm:$0xff]
    %v184 = vld [vmem:[%s176 + $0x38] sm:$0xff]
    %v185 = vld [vmem:[%s176 + $0x40] sm:$0xff]
    %v186 = vld [vmem:[%s176 + $0x48] sm:$0xff]
    %v187 = vld [vmem:[%s176 + $0x50] sm:$0xff]
    %v188 = vld [vmem:[%s176 + $0x58] sm:$0xff]
    %v189 = vld [vmem:[%s176 + $0x60] sm:$0xff]
    %v190 = vld [vmem:[%s176 + $0x68] sm:$0xff]
    %v191 = vld [vmem:[%s176 + $0x70] sm:$0xff]
    %v192 = vld [vmem:[%s176 + $0x78] sm:$0xff]
    %v193 = vld [vmem:[%s176 + $0x80] sm:$0xff]
    %v194 = vld [vmem:[%s176 + $0x88] sm:$0xff]
    %v195 = vsel %vm63, %v157, 0
    %v197 = vsel %vm63, %v161, 0
    %v199 = vsel %vm63, %v167, 0
    %v201 = vsel %vm63, %v171, 0
    %203 = vmatprep.subr.mxu0 0.0
    %204 = vmatpush1.msra.mxu0 %v177
    %205 = vmatprep.subr.mxu0 0.0
    %206 = vmatpush1.msra.mxu0 %v178
    %207 = vmatprep.subr.mxu0 0.0
    %208 = vmatpush1.msra.mxu0 %v179
    %209 = vmatprep.subr.mxu0 0.0
    %210 = vmatpush1.msra.mxu0 %v180
    %211 = vmatprep.subr.mxu0 0.0
    %212 = vmatpush1.msra.mxu0 %v181
    %213 = vmatprep.subr.mxu0 0.0
    %214 = vmatpush1.msra.mxu0 %v182
    %215 = vmatprep.subr.mxu0 0.0
    %216 = vmatpush1.msra.mxu0 %v183
    %217 = vmatprep.subr.mxu0 0.0
    %218 = vmatpush1.msra.mxu0 %v184
    %219 = vmatprep.subr.mxu0 0.0
    %220 = vmatpush1.msra.mxu0 %v185
    %221 = vmatprep.subr.mxu0 0.0
    %222 = vmatpush1.msra.mxu0 %v186
    %223 = vmatprep.subr.mxu0 0.0
    %224 = vmatpush1.msra.mxu0 %v187
    %225 = vmatprep.subr.mxu0 0.0
    %226 = vmatpush1.msra.mxu0 %v188
    %227 = vmatprep.subr.mxu0 0.0
    %228 = vmatpush1.msra.mxu0 %v189
    %229 = vmatprep.subr.mxu0 0.0
    %230 = vmatpush1.msra.mxu0 %v190
    %231 = vmatprep.subr.mxu0 0.0
    %232 = vmatpush1.msra.mxu0 %v191
    %233 = vmatprep.subr.mxu0 0.0
    %234 = vmatpush1.msra.mxu0 %v192
    %235 = vmatprep.subr.mxu0 0.0
    %236 = vmatpush1.msra.mxu0 %v193
    %237 = vmatprep.subr.mxu0 0.0
    %238 = vmatpush1.msra.mxu0 %v194
    %239 = vmatprep.subr.mxu0 0.0
    %240 = vmatpush1.msra.mxu0 0.0
    %241 = vmatprep.subr.mxu0 0.0
    %242 = vmatpush1.msra.mxu0 0.0
    %243 = vmatprep.subr.mxu0 0.0
    %244 = vmatpush1.msra.mxu0 0.0
    %245 = vmatprep.subr.mxu0 0.0
    %246 = vmatpush1.msra.mxu0 0.0
    %247 = vmatprep.subr.mxu0 0.0
    %248 = vmatpush1.msra.mxu0 0.0
    %249 = vmatprep.subr.mxu0 0.0
    %250 = vmatpush1.msra.mxu0 0.0
    %251 = vmatprep.subr.mxu0 0.0
    %252 = vmatpush1.msra.mxu0 0.0
    %253 = vmatprep.subr.mxu0 0.0
    %254 = vmatpush1.msra.mxu0 0.0
    %255 = vmatprep.subr.mxu0 0.0
    %256 = vmatpush1.msra.mxu0 0.0
    %257 = vmatprep.subr.mxu0 0.0
    %258 = vmatpush1.msra.mxu0 0.0
    %259 = vmatprep.subr.mxu0 0.0
    %260 = vmatpush1.msra.mxu0 0.0
    %261 = vmatprep.subr.mxu0 0.0
    %262 = vmatpush1.msra.mxu0 0.0
    %263 = vmatprep.subr.mxu0 0.0
    %264 = vmatpush1.msra.mxu0 0.0
    %265 = vmatprep.subr.mxu0 0.0
    %266 = vmatpush1.msra.mxu0 0.0
    %267 = vmatprep.mubr.f32.mxu0 %v195
    %268 = vmatmul.mubr.f32.gmra.mrb[0].mxu0 %v154
    %v269 = vpop.f32.mrb[0].mxu0
    %v270 = vadd.f32 0.0, %v269
    %v271 = vpop.f32.mrb[0].mxu0
    %272 = vmatprep.mubr.f32.mxu0 %v197
    %273 = vmatmul.mubr.f32.gmra.mrb[0].mxu0 %v159
    %v274 = vpop.f32.mrb[0].mxu0
    %v275 = vadd.f32 0.0, %v274
    %v276 = vpop.f32.mrb[0].mxu0
    %277 = vmatprep.mubr.f32.mxu0 %v199
    %278 = vmatmul.mubr.f32.gmra.mrb[0].mxu0 %v164
    %v279 = vpop.f32.mrb[0].mxu0
    %v280 = vadd.f32 0.0, %v279
    %v281 = vpop.f32.mrb[0].mxu0
    %282 = vmatprep.mubr.f32.mxu0 %v201
    %283 = vmatmul.mubr.f32.gmra.mrb[0].mxu0 %v169
    %v284 = vpop.f32.mrb[0].mxu0
    %v285 = vadd.f32 0.0, %v284
    %v286 = vpop.f32.mrb[0].mxu0
    %287 = vdwg.mxu0
    %v289 = vsel %vm63, %v106, 0
    %v291 = vsel %vm63, %v108, 0
    %v294 = vsel %vm63, %v110, 0
    %v296 = vsel %vm63, %v112, 0
    %298 = vmatprep.subr.mxu0 0.0
    %299 = vmatpush1.msra.mxu0 %v113
    %300 = vmatprep.subr.mxu0 0.0
    %301 = vmatpush1.msra.mxu0 %v114
    %302 = vmatprep.subr.mxu0 0.0
    %303 = vmatpush1.msra.mxu0 %v115
    %304 = vmatprep.subr.mxu0 0.0
    %305 = vmatpush1.msra.mxu0 %v116
    %306 = vmatprep.subr.mxu0 0.0
    %307 = vmatpush1.msra.mxu0 %v117
    %308 = vmatprep.subr.mxu0 0.0
    %309 = vmatpush1.msra.mxu0 %v118
    %310 = vmatprep.subr.mxu0 0.0
    %311 = vmatpush1.msra.mxu0 %v119
    %312 = vmatprep.subr.mxu0 0.0
    %313 = vmatpush1.msra.mxu0 %v120
    %314 = vmatprep.subr.mxu0 0.0
    %315 = vmatpush1.msra.mxu0 %v121
    %316 = vmatprep.subr.mxu0 0.0
    %317 = vmatpush1.msra.mxu0 %v122
    %318 = vmatprep.subr.mxu0 0.0
    %319 = vmatpush1.msra.mxu0 %v123
    %320 = vmatprep.subr.mxu0 0.0
    %321 = vmatpush1.msra.mxu0 %v124
    %322 = vmatprep.subr.mxu0 0.0
    %323 = vmatpush1.msra.mxu0 %v125
    %324 = vmatprep.subr.mxu0 0.0
    %325 = vmatpush1.msra.mxu0 %v126
    %326 = vmatprep.subr.mxu0 0.0
    %327 = vmatpush1.msra.mxu0 %v127
    %328 = vmatprep.subr.mxu0 0.0
    %329 = vmatpush1.msra.mxu0 %v128
    %330 = vmatprep.subr.mxu0 0.0
    %331 = vmatpush1.msra.mxu0 %v129
    %332 = vmatprep.subr.mxu0 0.0
    %333 = vmatpush1.msra.mxu0 %v130
    %334 = vmatprep.subr.mxu0 0.0
    %335 = vmatpush1.msra.mxu0 0.0
    %336 = vmatprep.subr.mxu0 0.0
    %337 = vmatpush1.msra.mxu0 0.0
    %338 = vmatprep.subr.mxu0 0.0
    %339 = vmatpush1.msra.mxu0 0.0
    %340 = vmatprep.subr.mxu0 0.0
    %341 = vmatpush1.msra.mxu0 0.0
    %342 = vmatprep.subr.mxu0 0.0
    %343 = vmatpush1.msra.mxu0 0.0
    %344 = vmatprep.subr.mxu0 0.0
    %345 = vmatpush1.msra.mxu0 0.0
    %346 = vmatprep.subr.mxu0 0.0
    %347 = vmatpush1.msra.mxu0 0.0
    %348 = vmatprep.subr.mxu0 0.0
    %349 = vmatpush1.msra.mxu0 0.0
    %350 = vmatprep.subr.mxu0 0.0
    %351 = vmatpush1.msra.mxu0 0.0
    %352 = vmatprep.subr.mxu0 0.0
    %353 = vmatpush1.msra.mxu0 0.0
    %354 = vmatprep.subr.mxu0 0.0
    %355 = vmatpush1.msra.mxu0 0.0
    %356 = vmatprep.subr.mxu0 0.0
    %357 = vmatpush1.msra.mxu0 0.0
    %358 = vmatprep.subr.mxu0 0.0
    %359 = vmatpush1.msra.mxu0 0.0
    %360 = vmatprep.subr.mxu0 0.0
    %361 = vmatpush1.msra.mxu0 0.0
    %362 = vmatprep.mubr.f32.mxu0 %v289
    %363 = vmatmul.mubr.f32.gmra.mrb[0].mxu0 %v105
    %v364 = vpop.f32.mrb[0].mxu0
    %v365 = vadd.f32 %v270, %v364
    %v366 = vpop.f32.mrb[0].mxu0
    %367 = vmatprep.mubr.f32.mxu0 %v291
    %368 = vmatmul.mubr.f32.gmra.mrb[0].mxu0 %v107
    %v369 = vpop.f32.mrb[0].mxu0
    %v370 = vadd.f32 %v275, %v369
    %v371 = vpop.f32.mrb[0].mxu0
    %372 = vmatprep.mubr.f32.mxu0 %v294
    %373 = vmatmul.mubr.f32.gmra.mrb[0].mxu0 %v109
    %v374 = vpop.f32.mrb[0].mxu0
    %v375 = vadd.f32 %v280, %v374
    %v376 = vpop.f32.mrb[0].mxu0
    %377 = vmatprep.mubr.f32.mxu0 %v296
    %378 = vmatmul.mubr.f32.gmra.mrb[0].mxu0 %v111
    %v379 = vpop.f32.mrb[0].mxu0
    %v380 = vadd.f32 %v285, %v379
    %v381 = vpop.f32.mrb[0].mxu0
    %382 = vdwg.mxu0
    %v383 = vld [vmem:[#allocation2] sm:$0xfc]
    %v384 = vld [vmem:[#allocation2 + $0x8] sm:$0xfc]
    %v385 = vld [vmem:[#allocation2 + $0x20] sm:$0x3]
    %v386 = vld [vmem:[#allocation2 + $0x28] sm:$0x3]
    %v387 = vld [vmem:[#allocation2 + $0x30] sm:$0xfc]
    %v388 = vld [vmem:[#allocation2 + $0x38] sm:$0xfc]
    %v389 = vld [vmem:[#allocation2 + $0x50] sm:$0x3]
    %v390 = vld [vmem:[#allocation2 + $0x58] sm:$0x3]
    %vm399 = vcmask 1045504
    %v400 = vrot.slane %v383, 2
    %v401 = vrot.slane %v107, 2
    %v402 = vsel %vm399, %v400, %v401
    %v403 = vrot.slane %v384, 2
    %v404 = vrot.slane %v108, 2
    %v405 = vsel %vm399, %v403, %v404
    %v406 = vrot.slane %v385, 2
    %v407 = vsel %vm399, %v401, %v406
    %v408 = vrot.slane %v386, 2
    %v409 = vsel %vm399, %v404, %v408
    %v410 = vrot.slane %v387, 2
    %v411 = vrot.slane %v111, 2
    %v412 = vsel %vm399, %v410, %v411
    %v413 = vrot.slane %v388, 2
    %v414 = vrot.slane %v112, 2
    %v415 = vsel %vm399, %v413, %v414
    %v416 = vrot.slane %v389, 2
    %v417 = vsel %vm399, %v411, %v416
    %v418 = vrot.slane %v390, 2
    %v419 = vsel %vm399, %v414, %v418
    %s424 = scalar_lea.vmem [#allocation6], 288
    %v425 = vld [vmem:[%s424] sm:$0xff]
    %v426 = vld [vmem:[%s424 + $0x8] sm:$0xff]
    %v427 = vld [vmem:[%s424 + $0x10] sm:$0xff]
    %v428 = vld [vmem:[%s424 + $0x18] sm:$0xff]
    %v429 = vld [vmem:[%s424 + $0x20] sm:$0xff]
    %v430 = vld [vmem:[%s424 + $0x28] sm:$0xff]
    %v431 = vld [vmem:[%s424 + $0x30] sm:$0xff]
    %v432 = vld [vmem:[%s424 + $0x38] sm:$0xff]
    %v433 = vld [vmem:[%s424 + $0x40] sm:$0xff]
    %v434 = vld [vmem:[%s424 + $0x48] sm:$0xff]
    %v435 = vld [vmem:[%s424 + $0x50] sm:$0xff]
    %v436 = vld [vmem:[%s424 + $0x58] sm:$0xff]
    %v437 = vld [vmem:[%s424 + $0x60] sm:$0xff]
    %v438 = vld [vmem:[%s424 + $0x68] sm:$0xff]
    %v439 = vld [vmem:[%s424 + $0x70] sm:$0xff]
    %v440 = vld [vmem:[%s424 + $0x78] sm:$0xff]
    %v441 = vld [vmem:[%s424 + $0x80] sm:$0xff]
    %v442 = vld [vmem:[%s424 + $0x88] sm:$0xff]
    %v443 = vsel %vm63, %v405, 0
    %v445 = vsel %vm63, %v409, 0
    %v447 = vsel %vm63, %v415, 0
    %v449 = vsel %vm63, %v419, 0
    %451 = vmatprep.subr.mxu0 0.0
    %452 = vmatpush1.msra.mxu0 %v425
    %453 = vmatprep.subr.mxu0 0.0
    %454 = vmatpush1.msra.mxu0 %v426
    %455 = vmatprep.subr.mxu0 0.0
    %456 = vmatpush1.msra.mxu0 %v427
    %457 = vmatprep.subr.mxu0 0.0
    %458 = vmatpush1.msra.mxu0 %v428
    %459 = vmatprep.subr.mxu0 0.0
    %460 = vmatpush1.msra.mxu0 %v429
    %461 = vmatprep.subr.mxu0 0.0
    %462 = vmatpush1.msra.mxu0 %v430
    %463 = vmatprep.subr.mxu0 0.0
    %464 = vmatpush1.msra.mxu0 %v431
    %465 = vmatprep.subr.mxu0 0.0
    %466 = vmatpush1.msra.mxu0 %v432
    %467 = vmatprep.subr.mxu0 0.0
    %468 = vmatpush1.msra.mxu0 %v433
    %469 = vmatprep.subr.mxu0 0.0
    %470 = vmatpush1.msra.mxu0 %v434
    %471 = vmatprep.subr.mxu0 0.0
    %472 = vmatpush1.msra.mxu0 %v435
    %473 = vmatprep.subr.mxu0 0.0
    %474 = vmatpush1.msra.mxu0 %v436
    %475 = vmatprep.subr.mxu0 0.0
    %476 = vmatpush1.msra.mxu0 %v437
    %477 = vmatprep.subr.mxu0 0.0
    %478 = vmatpush1.msra.mxu0 %v438
    %479 = vmatprep.subr.mxu0 0.0
    %480 = vmatpush1.msra.mxu0 %v439
    %481 = vmatprep.subr.mxu0 0.0
    %482 = vmatpush1.msra.mxu0 %v440
    %483 = vmatprep.subr.mxu0 0.0
    %484 = vmatpush1.msra.mxu0 %v441
    %485 = vmatprep.subr.mxu0 0.0
    %486 = vmatpush1.msra.mxu0 %v442
    %487 = vmatprep.subr.mxu0 0.0
    %488 = vmatpush1.msra.mxu0 0.0
    %489 = vmatprep.subr.mxu0 0.0
    %490 = vmatpush1.msra.mxu0 0.0
    %491 = vmatprep.subr.mxu0 0.0
    %492 = vmatpush1.msra.mxu0 0.0
    %493 = vmatprep.subr.mxu0 0.0
    %494 = vmatpush1.msra.mxu0 0.0
    %495 = vmatprep.subr.mxu0 0.0
    %496 = vmatpush1.msra.mxu0 0.0
    %497 = vmatprep.subr.mxu0 0.0
    %498 = vmatpush1.msra.mxu0 0.0
    %499 = vmatprep.subr.mxu0 0.0
    %500 = vmatpush1.msra.mxu0 0.0
    %501 = vmatprep.subr.mxu0 0.0
    %502 = vmatpush1.msra.mxu0 0.0
    %503 = vmatprep.subr.mxu0 0.0
    %504 = vmatpush1.msra.mxu0 0.0
    %505 = vmatprep.subr.mxu0 0.0
    %506 = vmatpush1.msra.mxu0 0.0
    %507 = vmatprep.subr.mxu0 0.0
    %508 = vmatpush1.msra.mxu0 0.0
    %509 = vmatprep.subr.mxu0 0.0
    %510 = vmatpush1.msra.mxu0 0.0
    %511 = vmatprep.subr.mxu0 0.0
    %512 = vmatpush1.msra.mxu0 0.0
    %513 = vmatprep.subr.mxu0 0.0
    %514 = vmatpush1.msra.mxu0 0.0
    %515 = vmatprep.mubr.f32.mxu0 %v443
    %516 = vmatmul.mubr.f32.gmra.mrb[0].mxu0 %v402
    %v517 = vpop.f32.mrb[0].mxu0
    %v518 = vadd.f32 0.0, %v517
    %v519 = vpop.f32.mrb[0].mxu0
    %520 = vmatprep.mubr.f32.mxu0 %v445
    %521 = vmatmul.mubr.f32.gmra.mrb[0].mxu0 %v407
    %v522 = vpop.f32.mrb[0].mxu0
    %v523 = vadd.f32 0.0, %v522
    %v524 = vpop.f32.mrb[0].mxu0
    %525 = vmatprep.mubr.f32.mxu0 %v447
    %526 = vmatmul.mubr.f32.gmra.mrb[0].mxu0 %v412
    %v527 = vpop.f32.mrb[0].mxu0
    %v528 = vadd.f32 0.0, %v527
    %v529 = vpop.f32.mrb[0].mxu0
    %530 = vmatprep.mubr.f32.mxu0 %v449
    %531 = vmatmul.mubr.f32.gmra.mrb[0].mxu0 %v417
    %v532 = vpop.f32.mrb[0].mxu0
    %v533 = vadd.f32 0.0, %v532
    %v534 = vpop.f32.mrb[0].mxu0
    %535 = vdwg.mxu0
    %v536 = vadd.f32 %v365, %v518
    %v537 = vadd.f32 %v370, %v523
    %v538 = vadd.f32 %v375, %v528
    %v539 = vadd.f32 %v380, %v533
    %v541 = vlaneseq
    %v542 = vshrl.u32 %v541, 7
    %v543 = vsub.s32 0, %v542
    %v544 = vrot.slane %v76, %v543
    %v546 = vadd.f32 %v536, %v544
    %v547 = vadd.f32 %v537, %v544
    %v548 = vadd.f32 %v538, %v544
    %v549 = vadd.f32 %v539, %v544
    %vm550 = vcmp.gt.f32.partialorder %v546, 0.0
    %vm551 = vcmp.gt.f32.partialorder %v547, 0.0
    %vm552 = vcmp.gt.f32.partialorder %v548, 0.0
    %vm553 = vcmp.gt.f32.partialorder %v549, 0.0
    %v554 = vmul.f32 %v546, 0.2
    %v555 = vmul.f32 %v547, 0.2
    %v556 = vmul.f32 %v548, 0.2
    %v557 = vmul.f32 %v549, 0.2
    %v558 = vsel %vm550, %v546, %v554
    %v559 = vsel %vm551, %v547, %v555
    %v560 = vsel %vm552, %v548, %v556
    %v561 = vsel %vm553, %v549, %v557
    %v566 = vrot.slane %v558, 7
    %v567 = vrot.slane %v559, 7
    %v568 = vsel %vm86, %v566, %v567
    %v569 = vrot.slane %v560, 7
    %v570 = vrot.slane %v561, 7
    %v571 = vsel %vm86, %v569, %v570
    %578 = vst [vmem:[#allocation2] sm:$0xfe] %v566
    %579 = vst [vmem:[#allocation2 + $0x10] sm:$0xff] %v568
    %580 = vst [vmem:[#allocation2 + $0x20] sm:$0x1] %v567
    %581 = vst [vmem:[#allocation2 + $0x30] sm:$0xfe] %v569
    %582 = vst [vmem:[#allocation2 + $0x40] sm:$0xff] %v571
    %583 = vst [vmem:[#allocation2 + $0x50] sm:$0x1] %v570
    %v584 = vld [vmem:[#allocation2] sm:$0xff]
    %v585 = vld [vmem:[#allocation2 + $0x8] sm:$0xff]
    %v586 = vld [vmem:[#allocation2 + $0x10] sm:$0xff]
    %v587 = vld [vmem:[#allocation2 + $0x18] sm:$0xff]
    %v588 = vld [vmem:[#allocation2 + $0x30] sm:$0xff]
    %v589 = vld [vmem:[#allocation2 + $0x38] sm:$0xff]
    %v590 = vld [vmem:[#allocation2 + $0x40] sm:$0xff]
    %v591 = vld [vmem:[#allocation2 + $0x48] sm:$0xff]
    %v592 = vld [vmem:[#allocation8] sm:$0xff]
    %v593 = vld [vmem:[#allocation8 + $0x8] sm:$0xff]
    %v594 = vld [vmem:[#allocation8 + $0x10] sm:$0xff]
    %v595 = vld [vmem:[#allocation8 + $0x18] sm:$0xff]
    %v596 = vld [vmem:[#allocation8 + $0x20] sm:$0xff]
    %v597 = vld [vmem:[#allocation8 + $0x28] sm:$0xff]
    %v598 = vld [vmem:[#allocation8 + $0x30] sm:$0xff]
    %v599 = vld [vmem:[#allocation8 + $0x38] sm:$0xff]
    %v600 = vld [vmem:[#allocation8 + $0x40] sm:$0xff]
    %v601 = vld [vmem:[#allocation8 + $0x48] sm:$0xff]
    %v602 = vld [vmem:[#allocation8 + $0x50] sm:$0xff]
    %v603 = vld [vmem:[#allocation8 + $0x58] sm:$0xff]
    %v604 = vld [vmem:[#allocation8 + $0x60] sm:$0xff]
    %v605 = vld [vmem:[#allocation8 + $0x68] sm:$0xff]
    %v606 = vld [vmem:[#allocation8 + $0x70] sm:$0xff]
    %v607 = vld [vmem:[#allocation8 + $0x78] sm:$0xff]
    %v608 = vld [vmem:[#allocation8 + $0x80] sm:$0xff]
    %v609 = vld [vmem:[#allocation8 + $0x88] sm:$0xff]
    %v610 = vld [vmem:[#allocation2] sm:$0xfe]
    %v611 = vld [vmem:[#allocation2 + $0x8] sm:$0xfe]
    %v612 = vld [vmem:[#allocation2 + $0x20] sm:$0x1]
    %v613 = vld [vmem:[#allocation2 + $0x28] sm:$0x1]
    %v614 = vld [vmem:[#allocation2 + $0x30] sm:$0xfe]
    %v615 = vld [vmem:[#allocation2 + $0x38] sm:$0xfe]
    %v616 = vld [vmem:[#allocation2 + $0x50] sm:$0x1]
    %v617 = vld [vmem:[#allocation2 + $0x58] sm:$0x1]
    %v630 = vrot.slane %v610, 1
    %v631 = vrot.slane %v586, 1
    %v632 = vsel %vm151, %v630, %v631
    %v633 = vrot.slane %v611, 1
    %v634 = vrot.slane %v587, 1
    %v635 = vsel %vm151, %v633, %v634
    %v636 = vrot.slane %v612, 1
    %v637 = vsel %vm151, %v631, %v636
    %v638 = vrot.slane %v613, 1
    %v639 = vsel %vm151, %v634, %v638
    %v640 = vrot.slane %v614, 1
    %v641 = vrot.slane %v590, 1
    %v642 = vsel %vm151, %v640, %v641
    %v643 = vrot.slane %v615, 1
    %v644 = vrot.slane %v591, 1
    %v645 = vsel %vm151, %v643, %v644
    %v646 = vrot.slane %v616, 1
    %v647 = vsel %vm151, %v641, %v646
    %v648 = vrot.slane %v617, 1
    %v649 = vsel %vm151, %v644, %v648
    %s654 = scalar_lea.vmem [#allocation8], 144
    %v655 = vld [vmem:[%s654] sm:$0xff]
    %v656 = vld [vmem:[%s654 + $0x8] sm:$0xff]
    %v657 = vld [vmem:[%s654 + $0x10] sm:$0xff]
    %v658 = vld [vmem:[%s654 + $0x18] sm:$0xff]
    %v659 = vld [vmem:[%s654 + $0x20] sm:$0xff]
    %v660 = vld [vmem:[%s654 + $0x28] sm:$0xff]
    %v661 = vld [vmem:[%s654 + $0x30] sm:$0xff]
    %v662 = vld [vmem:[%s654 + $0x38] sm:$0xff]
    %v663 = vld [vmem:[%s654 + $0x40] sm:$0xff]
    %v664 = vld [vmem:[%s654 + $0x48] sm:$0xff]
    %v665 = vld [vmem:[%s654 + $0x50] sm:$0xff]
    %v666 = vld [vmem:[%s654 + $0x58] sm:$0xff]
    %v667 = vld [vmem:[%s654 + $0x60] sm:$0xff]
    %v668 = vld [vmem:[%s654 + $0x68] sm:$0xff]
    %v669 = vld [vmem:[%s654 + $0x70] sm:$0xff]
    %v670 = vld [vmem:[%s654 + $0x78] sm:$0xff]
    %v671 = vld [vmem:[%s654 + $0x80] sm:$0xff]
    %v672 = vld [vmem:[%s654 + $0x88] sm:$0xff]
    %v673 = vsel %vm63, %v635, 0
    %v675 = vsel %vm63, %v639, 0
    %v677 = vsel %vm63, %v645, 0
    %v679 = vsel %vm63, %v649, 0
    %681 = vmatprep.subr.mxu0 0.0
    %682 = vmatpush1.msra.mxu0 %v655
    %683 = vmatprep.subr.mxu0 0.0
    %684 = vmatpush1.msra.mxu0 %v656
    %685 = vmatprep.subr.mxu0 0.0
    %686 = vmatpush1.msra.mxu0 %v657
    %687 = vmatprep.subr.mxu0 0.0
    %688 = vmatpush1.msra.mxu0 %v658
    %689 = vmatprep.subr.mxu0 0.0
    %690 = vmatpush1.msra.mxu0 %v659
    %691 = vmatprep.subr.mxu0 0.0
    %692 = vmatpush1.msra.mxu0 %v660
    %693 = vmatprep.subr.mxu0 0.0
    %694 = vmatpush1.msra.mxu0 %v661
    %695 = vmatprep.subr.mxu0 0.0
    %696 = vmatpush1.msra.mxu0 %v662
    %697 = vmatprep.subr.mxu0 0.0
    %698 = vmatpush1.msra.mxu0 %v663
    %699 = vmatprep.subr.mxu0 0.0
    %700 = vmatpush1.msra.mxu0 %v664
    %701 = vmatprep.subr.mxu0 0.0
    %702 = vmatpush1.msra.mxu0 %v665
    %703 = vmatprep.subr.mxu0 0.0
    %704 = vmatpush1.msra.mxu0 %v666
    %705 = vmatprep.subr.mxu0 0.0
    %706 = vmatpush1.msra.mxu0 %v667
    %707 = vmatprep.subr.mxu0 0.0
    %708 = vmatpush1.msra.mxu0 %v668
    %709 = vmatprep.subr.mxu0 0.0
    %710 = vmatpush1.msra.mxu0 %v669
    %711 = vmatprep.subr.mxu0 0.0
    %712 = vmatpush1.msra.mxu0 %v670
    %713 = vmatprep.subr.mxu0 0.0
    %714 = vmatpush1.msra.mxu0 %v671
    %715 = vmatprep.subr.mxu0 0.0
    %716 = vmatpush1.msra.mxu0 %v672
    %717 = vmatprep.subr.mxu0 0.0
    %718 = vmatpush1.msra.mxu0 0.0
    %719 = vmatprep.subr.mxu0 0.0
    %720 = vmatpush1.msra.mxu0 0.0
    %721 = vmatprep.subr.mxu0 0.0
    %722 = vmatpush1.msra.mxu0 0.0
    %723 = vmatprep.subr.mxu0 0.0
    %724 = vmatpush1.msra.mxu0 0.0
    %725 = vmatprep.subr.mxu0 0.0
    %726 = vmatpush1.msra.mxu0 0.0
    %727 = vmatprep.subr.mxu0 0.0
    %728 = vmatpush1.msra.mxu0 0.0
    %729 = vmatprep.subr.mxu0 0.0
    %730 = vmatpush1.msra.mxu0 0.0
    %731 = vmatprep.subr.mxu0 0.0
    %732 = vmatpush1.msra.mxu0 0.0
    %733 = vmatprep.subr.mxu0 0.0
    %734 = vmatpush1.msra.mxu0 0.0
    %735 = vmatprep.subr.mxu0 0.0
    %736 = vmatpush1.msra.mxu0 0.0
    %737 = vmatprep.subr.mxu0 0.0
    %738 = vmatpush1.msra.mxu0 0.0
    %739 = vmatprep.subr.mxu0 0.0
    %740 = vmatpush1.msra.mxu0 0.0
    %741 = vmatprep.subr.mxu0 0.0
    %742 = vmatpush1.msra.mxu0 0.0
    %743 = vmatprep.subr.mxu0 0.0
    %744 = vmatpush1.msra.mxu0 0.0
    %745 = vmatprep.mubr.f32.mxu0 %v673
    %746 = vmatmul.mubr.f32.gmra.mrb[0].mxu0 %v632
    %v747 = vpop.f32.mrb[0].mxu0
    %v748 = vadd.f32 0.0, %v747
    %v749 = vpop.f32.mrb[0].mxu0
    %750 = vmatprep.mubr.f32.mxu0 %v675
    %751 = vmatmul.mubr.f32.gmra.mrb[0].mxu0 %v637
    %v752 = vpop.f32.mrb[0].mxu0
    %v753 = vadd.f32 0.0, %v752
    %v754 = vpop.f32.mrb[0].mxu0
    %755 = vmatprep.mubr.f32.mxu0 %v677
    %756 = vmatmul.mubr.f32.gmra.mrb[0].mxu0 %v642
    %v757 = vpop.f32.mrb[0].mxu0
    %v758 = vadd.f32 0.0, %v757
    %v759 = vpop.f32.mrb[0].mxu0
    %760 = vmatprep.mubr.f32.mxu0 %v679
    %761 = vmatmul.mubr.f32.gmra.mrb[0].mxu0 %v647
    %v762 = vpop.f32.mrb[0].mxu0
    %v763 = vadd.f32 0.0, %v762
    %v764 = vpop.f32.mrb[0].mxu0
    %765 = vdwg.mxu0
    %v767 = vsel %vm63, %v585, 0
    %v769 = vsel %vm63, %v587, 0
    %v772 = vsel %vm63, %v589, 0
    %v774 = vsel %vm63, %v591, 0
    %776 = vmatprep.subr.mxu0 0.0
    %777 = vmatpush1.msra.mxu0 %v592
    %778 = vmatprep.subr.mxu0 0.0
    %779 = vmatpush1.msra.mxu0 %v593
    %780 = vmatprep.subr.mxu0 0.0
    %781 = vmatpush1.msra.mxu0 %v594
    %782 = vmatprep.subr.mxu0 0.0
    %783 = vmatpush1.msra.mxu0 %v595
    %784 = vmatprep.subr.mxu0 0.0
    %785 = vmatpush1.msra.mxu0 %v596
    %786 = vmatprep.subr.mxu0 0.0
    %787 = vmatpush1.msra.mxu0 %v597
    %788 = vmatprep.subr.mxu0 0.0
    %789 = vmatpush1.msra.mxu0 %v598
    %790 = vmatprep.subr.mxu0 0.0
    %791 = vmatpush1.msra.mxu0 %v599
    %792 = vmatprep.subr.mxu0 0.0
    %793 = vmatpush1.msra.mxu0 %v600
    %794 = vmatprep.subr.mxu0 0.0
    %795 = vmatpush1.msra.mxu0 %v601
    %796 = vmatprep.subr.mxu0 0.0
    %797 = vmatpush1.msra.mxu0 %v602
    %798 = vmatprep.subr.mxu0 0.0
    %799 = vmatpush1.msra.mxu0 %v603
    %800 = vmatprep.subr.mxu0 0.0
    %801 = vmatpush1.msra.mxu0 %v604
    %802 = vmatprep.subr.mxu0 0.0
    %803 = vmatpush1.msra.mxu0 %v605
    %804 = vmatprep.subr.mxu0 0.0
    %805 = vmatpush1.msra.mxu0 %v606
    %806 = vmatprep.subr.mxu0 0.0
    %807 = vmatpush1.msra.mxu0 %v607
    %808 = vmatprep.subr.mxu0 0.0
    %809 = vmatpush1.msra.mxu0 %v608
    %810 = vmatprep.subr.mxu0 0.0
    %811 = vmatpush1.msra.mxu0 %v609
    %812 = vmatprep.subr.mxu0 0.0
    %813 = vmatpush1.msra.mxu0 0.0
    %814 = vmatprep.subr.mxu0 0.0
    %815 = vmatpush1.msra.mxu0 0.0
    %816 = vmatprep.subr.mxu0 0.0
    %817 = vmatpush1.msra.mxu0 0.0
    %818 = vmatprep.subr.mxu0 0.0
    %819 = vmatpush1.msra.mxu0 0.0
    %820 = vmatprep.subr.mxu0 0.0
    %821 = vmatpush1.msra.mxu0 0.0
    %822 = vmatprep.subr.mxu0 0.0
    %823 = vmatpush1.msra.mxu0 0.0
    %824 = vmatprep.subr.mxu0 0.0
    %825 = vmatpush1.msra.mxu0 0.0
    %826 = vmatprep.subr.mxu0 0.0
    %827 = vmatpush1.msra.mxu0 0.0
    %828 = vmatprep.subr.mxu0 0.0
    %829 = vmatpush1.msra.mxu0 0.0
    %830 = vmatprep.subr.mxu0 0.0
    %831 = vmatpush1.msra.mxu0 0.0
    %832 = vmatprep.subr.mxu0 0.0
    %833 = vmatpush1.msra.mxu0 0.0
    %834 = vmatprep.subr.mxu0 0.0
    %835 = vmatpush1.msra.mxu0 0.0
    %836 = vmatprep.subr.mxu0 0.0
    %837 = vmatpush1.msra.mxu0 0.0
    %838 = vmatprep.subr.mxu0 0.0
    %839 = vmatpush1.msra.mxu0 0.0
    %840 = vmatprep.mubr.f32.mxu0 %v767
    %841 = vmatmul.mubr.f32.gmra.mrb[0].mxu0 %v584
    %v842 = vpop.f32.mrb[0].mxu0
    %v843 = vadd.f32 %v748, %v842
    %v844 = vpop.f32.mrb[0].mxu0
    %845 = vmatprep.mubr.f32.mxu0 %v769
    %846 = vmatmul.mubr.f32.gmra.mrb[0].mxu0 %v586
    %v847 = vpop.f32.mrb[0].mxu0
    %v848 = vadd.f32 %v753, %v847
    %v849 = vpop.f32.mrb[0].mxu0
    %850 = vmatprep.mubr.f32.mxu0 %v772
    %851 = vmatmul.mubr.f32.gmra.mrb[0].mxu0 %v588
    %v852 = vpop.f32.mrb[0].mxu0
    %v853 = vadd.f32 %v758, %v852
    %v854 = vpop.f32.mrb[0].mxu0
    %855 = vmatprep.mubr.f32.mxu0 %v774
    %856 = vmatmul.mubr.f32.gmra.mrb[0].mxu0 %v590
    %v857 = vpop.f32.mrb[0].mxu0
    %v858 = vadd.f32 %v763, %v857
    %v859 = vpop.f32.mrb[0].mxu0
    %860 = vdwg.mxu0
    %v861 = vld [vmem:[#allocation2] sm:$0xfc]
    %v862 = vld [vmem:[#allocation2 + $0x8] sm:$0xfc]
    %v863 = vld [vmem:[#allocation2 + $0x20] sm:$0x3]
    %v864 = vld [vmem:[#allocation2 + $0x28] sm:$0x3]
    %v865 = vld [vmem:[#allocation2 + $0x30] sm:$0xfc]
    %v866 = vld [vmem:[#allocation2 + $0x38] sm:$0xfc]
    %v867 = vld [vmem:[#allocation2 + $0x50] sm:$0x3]
    %v868 = vld [vmem:[#allocation2 + $0x58] sm:$0x3]
    %v877 = vrot.slane %v861, 2
    %v878 = vrot.slane %v586, 2
    %v879 = vsel %vm399, %v877, %v878
    %v880 = vrot.slane %v862, 2
    %v881 = vrot.slane %v587, 2
    %v882 = vsel %vm399, %v880, %v881
    %v883 = vrot.slane %v863, 2
    %v884 = vsel %vm399, %v878, %v883
    %v885 = vrot.slane %v864, 2
    %v886 = vsel %vm399, %v881, %v885
    %v887 = vrot.slane %v865, 2
    %v888 = vrot.slane %v590, 2
    %v889 = vsel %vm399, %v887, %v888
    %v890 = vrot.slane %v866, 2
    %v891 = vrot.slane %v591, 2
    %v892 = vsel %vm399, %v890, %v891
    %v893 = vrot.slane %v867, 2
    %v894 = vsel %vm399, %v888, %v893
    %v895 = vrot.slane %v868, 2
    %v896 = vsel %vm399, %v891, %v895
    %s901 = scalar_lea.vmem [#allocation8], 288
    %v902 = vld [vmem:[%s901] sm:$0xff]
    %v903 = vld [vmem:[%s901 + $0x8] sm:$0xff]
    %v904 = vld [vmem:[%s901 + $0x10] sm:$0xff]
    %v905 = vld [vmem:[%s901 + $0x18] sm:$0xff]
    %v906 = vld [vmem:[%s901 + $0x20] sm:$0xff]
    %v907 = vld [vmem:[%s901 + $0x28] sm:$0xff]
    %v908 = vld [vmem:[%s901 + $0x30] sm:$0xff]
    %v909 = vld [vmem:[%s901 + $0x38] sm:$0xff]
    %v910 = vld [vmem:[%s901 + $0x40] sm:$0xff]
    %v911 = vld [vmem:[%s901 + $0x48] sm:$0xff]
    %v912 = vld [vmem:[%s901 + $0x50] sm:$0xff]
    %v913 = vld [vmem:[%s901 + $0x58] sm:$0xff]
    %v914 = vld [vmem:[%s901 + $0x60] sm:$0xff]
    %v915 = vld [vmem:[%s901 + $0x68] sm:$0xff]
    %v916 = vld [vmem:[%s901 + $0x70] sm:$0xff]
    %v917 = vld [vmem:[%s901 + $0x78] sm:$0xff]
    %v918 = vld [vmem:[%s901 + $0x80] sm:$0xff]
    %v919 = vld [vmem:[%s901 + $0x88] sm:$0xff]
    %v920 = vsel %vm63, %v882, 0
    %v922 = vsel %vm63, %v886, 0
    %v924 = vsel %vm63, %v892, 0
    %v926 = vsel %vm63, %v896, 0
    %928 = vmatprep.subr.mxu0 0.0
    %929 = vmatpush1.msra.mxu0 %v902
    %930 = vmatprep.subr.mxu0 0.0
    %931 = vmatpush1.msra.mxu0 %v903
    %932 = vmatprep.subr.mxu0 0.0
    %933 = vmatpush1.msra.mxu0 %v904
    %934 = vmatprep.subr.mxu0 0.0
    %935 = vmatpush1.msra.mxu0 %v905
    %936 = vmatprep.subr.mxu0 0.0
    %937 = vmatpush1.msra.mxu0 %v906
    %938 = vmatprep.subr.mxu0 0.0
    %939 = vmatpush1.msra.mxu0 %v907
    %940 = vmatprep.subr.mxu0 0.0
    %941 = vmatpush1.msra.mxu0 %v908
    %942 = vmatprep.subr.mxu0 0.0
    %943 = vmatpush1.msra.mxu0 %v909
    %944 = vmatprep.subr.mxu0 0.0
    %945 = vmatpush1.msra.mxu0 %v910
    %946 = vmatprep.subr.mxu0 0.0
    %947 = vmatpush1.msra.mxu0 %v911
    %948 = vmatprep.subr.mxu0 0.0
    %949 = vmatpush1.msra.mxu0 %v912
    %950 = vmatprep.subr.mxu0 0.0
    %951 = vmatpush1.msra.mxu0 %v913
    %952 = vmatprep.subr.mxu0 0.0
    %953 = vmatpush1.msra.mxu0 %v914
    %954 = vmatprep.subr.mxu0 0.0
    %955 = vmatpush1.msra.mxu0 %v915
    %956 = vmatprep.subr.mxu0 0.0
    %957 = vmatpush1.msra.mxu0 %v916
    %958 = vmatprep.subr.mxu0 0.0
    %959 = vmatpush1.msra.mxu0 %v917
    %960 = vmatprep.subr.mxu0 0.0
    %961 = vmatpush1.msra.mxu0 %v918
    %962 = vmatprep.subr.mxu0 0.0
    %963 = vmatpush1.msra.mxu0 %v919
    %964 = vmatprep.subr.mxu0 0.0
    %965 = vmatpush1.msra.mxu0 0.0
    %966 = vmatprep.subr.mxu0 0.0
    %967 = vmatpush1.msra.mxu0 0.0
    %968 = vmatprep.subr.mxu0 0.0
    %969 = vmatpush1.msra.mxu0 0.0
    %970 = vmatprep.subr.mxu0 0.0
    %971 = vmatpush1.msra.mxu0 0.0
    %972 = vmatprep.subr.mxu0 0.0
    %973 = vmatpush1.msra.mxu0 0.0
    %974 = vmatprep.subr.mxu0 0.0
    %975 = vmatpush1.msra.mxu0 0.0
    %976 = vmatprep.subr.mxu0 0.0
    %977 = vmatpush1.msra.mxu0 0.0
    %978 = vmatprep.subr.mxu0 0.0
    %979 = vmatpush1.msra.mxu0 0.0
    %980 = vmatprep.subr.mxu0 0.0
    %981 = vmatpush1.msra.mxu0 0.0
    %982 = vmatprep.subr.mxu0 0.0
    %983 = vmatpush1.msra.mxu0 0.0
    %984 = vmatprep.subr.mxu0 0.0
    %985 = vmatpush1.msra.mxu0 0.0
    %986 = vmatprep.subr.mxu0 0.0
    %987 = vmatpush1.msra.mxu0 0.0
    %988 = vmatprep.subr.mxu0 0.0
    %989 = vmatpush1.msra.mxu0 0.0
    %990 = vmatprep.subr.mxu0 0.0
    %991 = vmatpush1.msra.mxu0 0.0
    %992 = vmatprep.mubr.f32.mxu0 %v920
    %993 = vmatmul.mubr.f32.gmra.mrb[0].mxu0 %v879
    %v994 = vpop.f32.mrb[0].mxu0
    %v995 = vadd.f32 0.0, %v994
    %v996 = vpop.f32.mrb[0].mxu0
    %997 = vmatprep.mubr.f32.mxu0 %v922
    %998 = vmatmul.mubr.f32.gmra.mrb[0].mxu0 %v884
    %v999 = vpop.f32.mrb[0].mxu0
    %v1000 = vadd.f32 0.0, %v999
    %v1001 = vpop.f32.mrb[0].mxu0
    %1002 = vmatprep.mubr.f32.mxu0 %v924
    %1003 = vmatmul.mubr.f32.gmra.mrb[0].mxu0 %v889
    %v1004 = vpop.f32.mrb[0].mxu0
    %v1005 = vadd.f32 0.0, %v1004
    %v1006 = vpop.f32.mrb[0].mxu0
    %1007 = vmatprep.mubr.f32.mxu0 %v926
    %1008 = vmatmul.mubr.f32.gmra.mrb[0].mxu0 %v894
    %v1009 = vpop.f32.mrb[0].mxu0
    %v1010 = vadd.f32 0.0, %v1009
    %v1011 = vpop.f32.mrb[0].mxu0
    %1012 = vdwg.mxu0
    %v1013 = vadd.f32 %v843, %v995
    %v1014 = vadd.f32 %v848, %v1000
    %v1015 = vadd.f32 %v853, %v1005
    %v1016 = vadd.f32 %v858, %v1010
    %v1018 = vlaneseq
    %v1019 = vshrl.u32 %v1018, 7
    %v1020 = vsub.s32 0, %v1019
    %v1021 = vrot.slane %v77, %v1020
    %v1023 = vadd.f32 %v1013, %v1021
    %v1024 = vadd.f32 %v1014, %v1021
    %v1025 = vadd.f32 %v1015, %v1021
    %v1026 = vadd.f32 %v1016, %v1021
    %v1027 = vadd.f32 %v1023, %v78
    %v1028 = vadd.f32 %v1024, %v79
    %v1029 = vadd.f32 %v1025, %v80
    %v1030 = vadd.f32 %v1026, %v81
    %vm1031 = vcmp.gt.f32.partialorder %v1027, 0.0
    %vm1032 = vcmp.gt.f32.partialorder %v1028, 0.0
    %vm1033 = vcmp.gt.f32.partialorder %v1029, 0.0
    %vm1034 = vcmp.gt.f32.partialorder %v1030, 0.0
    %v1035 = vmul.f32 %v1027, 0.2
    %v1036 = vmul.f32 %v1028, 0.2
    %v1037 = vmul.f32 %v1029, 0.2
    %v1038 = vmul.f32 %v1030, 0.2
    %v1039 = vsel %vm1031, %v1027, %v1035
    %v1040 = vsel %vm1032, %v1028, %v1036
    %v1041 = vsel %vm1033, %v1029, %v1037
    %v1042 = vsel %vm1034, %v1030, %v1038
    %1043 = vst [vmem:[#allocation9] sm:$0xff] %v1039
    %1044 = vst [vmem:[#allocation9 + $0x8] sm:$0xff] %v1040
    %1045 = vst [vmem:[#allocation9 + $0x10] sm:$0xff] %v1041
    %1046 = vst [vmem:[#allocation9 + $0x18] sm:$0xff] %v1042
    // Predicated region
    $region34: #{tpu_custom_call.1} parent=1 // pred_check
      _
    $region35: #{tpu_custom_call.1} parent=1 // pred_check_branch
      %1048 = sbr.rel (0) target = $region37
    $region36: #{tpu_custom_call.1} parent=1 // pred_region
      %s1050 = ssub.s32 512, 512
      %1051 = vsyncadd [#allocation5], %s1050
      %s1052 = sshll.u32 [#allocation9], 4
      %s1053 = int_to_ptr.vmem [resolvable:$true] %s1052
      %1058 = dma.vmem_to_hbm [thread:$0]  %s1053, 512, %s5, [#allocation5], 128, 128, 8
    $region37: #{tpu_custom_call.1} parent=1 // pred_fallthru
      _
    // Predicated region
    $region38: #{tpu_custom_call.1} parent=1 // pred_check
      _
    $region39: #{tpu_custom_call.1} parent=1 // pred_check_branch
      %1060 = sbr.rel (0) target = $region41
    $region40: #{tpu_custom_call.1} parent=1 // pred_region
      %1061 = dma.done [#allocation5], 512
    $region41: #{tpu_custom_call.1} parent=1 // pred_fallthru
      _
    %1062 = vsyncpa [#allocation4], 1
    %1063 = vsyncpa [#allocation7], 1
    %1064 = vsyncpa [#allocation5], 1

</llo_original>
